<compile_context>
chip_gen: v6e
topology: v6e:2x2x1
jax: 0.10.0
libtpu: 0.0.40
codegen_flags: <defaults>
</compile_context>

<pallas_src>
import functools

import jax
import jax.numpy as jnp
from jax.experimental import pallas as pl
from jax.experimental.pallas import tpu as pltpu


# ---------------------------------------------------------------------------
# Kernel
# ---------------------------------------------------------------------------

def _adain_fused_kernel(x_ref, w_ref, b_ref, o_ref, *, eps, inv_n):
    """Fused instance-norm + affine on one (block_bc, P) slab.

    x_ref / o_ref: (block_bc, P) tile of the flattened (B*C, H*W) input/output.
    w_ref / b_ref: (block_bc, 1) per-instance AdaIN affine parameters (f32).
    """
    x = x_ref[...].astype(jnp.float32)                         # (block_bc, P)
    # Pass 1 (in-VMEM): mean.  Block covers the full P dim, so lane padding of
    # ragged H*W is masked by Mosaic inside the reduction.
    mean = jnp.sum(x, axis=1, keepdims=True) * jnp.float32(inv_n)
    # Pass 2 (in-VMEM): centered, biased variance (training=True semantics).
    d = x - mean
    var = jnp.sum(d * d, axis=1, keepdims=True) * jnp.float32(inv_n)
    rstd = jax.lax.rsqrt(var + jnp.float32(eps))
    scale = w_ref[...] * rstd                                   # (block_bc, 1)
    # y = (x - mean) * (w * rstd) + b   — single FMA per element, lane-dense.
    o_ref[...] = (d * scale + b_ref[...]).astype(o_ref.dtype)


# ---------------------------------------------------------------------------
# Tile selection
# ---------------------------------------------------------------------------

def _select_block_bc(BC, P, itemsize, requested=None):
    """Rows (instances) per block: dtype-aware sublane multiple, ~2 MiB f32 slab."""
    pack = {1: 32, 2: 16}.get(itemsize, 8)          # sublane packing per dtype
    if requested is not None:
        r = min(int(requested), BC)
        if r != BC:
            r = min(max(pack, (r // pack) * pack), BC)
        if r != BC and r % pack != 0:
            r = BC
        return r
    max_f32_elems = 512 * 1024                      # ~2 MiB of f32 per slab
    rows = max(1, max_f32_elems // max(P, 1))
    rows = (rows // pack) * pack
    if rows == 0:
        # TODO(synk): extremely large H*W (single packed row group > budget)
        # would want a streamed two-pass fallback; accept a larger slab here.
        rows = pack
    rows = min(rows, BC)
    if rows >= BC:
        rows = BC
        # Keep >= 2 grid steps so both v7x TensorCores get work.
        if BC >= 2 * pack and (BC // 2) % pack == 0:
            rows = BC // 2
    if rows != BC and rows % pack != 0:
        rows = BC
    return rows


# ---------------------------------------------------------------------------
# Wrapper
# ---------------------------------------------------------------------------

def adaptive_instance_norm_2d(x, weight, bias, *, eps=1e-5, block_bc=None):
    """AdaptiveInstanceNorm2d forward.

    x: (B, C, H, W); weight/bias: (B*C,) (or (B, C)) AdaIN affine parameters.
    Returns (B, C, H, W) in x.dtype.
    """
    B, C, H, W = x.shape
    P = H * W
    BC = B * C
    xf = x.reshape(BC, P)                               # H*W on the lane axis
    w2 = jnp.asarray(weight, jnp.float32).reshape(BC, 1)
    b2 = jnp.asarray(bias, jnp.float32).reshape(BC, 1)

    itemsize = jnp.dtype(x.dtype).itemsize
    bbc = _select_block_bc(BC, P, itemsize, block_bc)
    n_bc = pl.cdiv(BC, bbc)

    # VMEM budget: double-buffered in/out slabs + f32 temporaries for the
    # centered-variance pass.  Default slab (~2 MiB f32) keeps this well under
    # v7x's 64 MiB physical VMEM; limit raised only if a huge P forces it.
    slab_f32 = bbc * P * 4
    slab_io = bbc * P * itemsize
    vmem_limit = int(min(max(48 << 20, 4 * slab_io + 4 * slab_f32 + (8 << 20)),
                         112 << 20))

    x_spec = pl.BlockSpec((bbc, P), lambda i: (i, 0))
    vec_spec = pl.BlockSpec((bbc, 1), lambda i: (i, 0))

    out = pl.pallas_call(
        functools.partial(_adain_fused_kernel, eps=eps, inv_n=1.0 / P),
        out_shape=jax.ShapeDtypeStruct((BC, P), x.dtype),
        grid=(n_bc,),
        in_specs=[x_spec, vec_spec, vec_spec],
        out_specs=x_spec,
        compiler_params=pltpu.CompilerParams(
            dimension_semantics=("parallel",),
            vmem_limit_bytes=vmem_limit),
    )(xf, w2, b2)

    # TODO(synk): running_mean / running_var momentum updates (training-mode
    # buffer side effect of F.batch_norm) are not part of the returned tensor
    # and are not computed here.
    return out.reshape(B, C, H, W)


# ---------------------------------------------------------------------------
# Pure-JAX reference (matches F.batch_norm(..., training=True) on the reshaped x)
# ---------------------------------------------------------------------------

def _reference_adain(x, weight, bias, eps=1e-5):
    B, C, H, W = x.shape
    xf = x.astype(jnp.float32)
    mean = xf.mean(axis=(2, 3), keepdims=True)
    var = ((xf - mean) ** 2).mean(axis=(2, 3), keepdims=True)   # biased variance
    y = (xf - mean) * jax.lax.rsqrt(var + eps)
    w = jnp.asarray(weight, jnp.float32).reshape(B, C, 1, 1)
    b = jnp.asarray(bias, jnp.float32).reshape(B, C, 1, 1)
    return y * w + b


# ---------------------------------------------------------------------------

if __name__ == "__main__":
    key = jax.random.PRNGKey(0)
    eps = 1e-5

    # Config 1: default tiling (BC split in two so both TCs get work).
    B, C, H, W = 2, 64, 32, 32
    kx, kw, kb = jax.random.split(key, 3)
    x = 1.5 * jax.random.normal(kx, (B, C, H, W), jnp.float32) + 0.3
    weight = 1.0 + 0.2 * jax.random.normal(kw, (B * C,), jnp.float32)  # AdaIN "std"
    bias = 0.1 * jax.random.normal(kb, (B * C,), jnp.float32)          # AdaIN "mean"

    out = jax.block_until_ready(adaptive_instance_norm_2d(x, weight, bias, eps=eps))
    ref = _reference_adain(x, weight, bias, eps=eps)
    assert out.shape == (B, C, H, W), out.shape
    assert bool(jnp.all(jnp.isfinite(out)))
    assert bool(jnp.allclose(out, ref, atol=1e-4, rtol=1e-4)), \
        float(jnp.max(jnp.abs(out - ref)))

    # Config 2: forced small BC tiling (multiple grid steps).
    out2 = jax.block_until_ready(
        adaptive_instance_norm_2d(x, weight, bias, eps=eps, block_bc=16))
    assert bool(jnp.allclose(out2, ref, atol=1e-4, rtol=1e-4)), \
        float(jnp.max(jnp.abs(out2 - ref)))

    # Config 3: ragged spatial extent (H*W not a multiple of 128); the block
    # covers the full lane dim so reductions mask the padding internally.
    B3, C3, H3, W3 = 2, 48, 17, 19
    k3x, k3w, k3b = jax.random.split(jax.random.fold_in(key, 7), 3)
    x3 = jax.random.normal(k3x, (B3, C3, H3, W3), jnp.float32)
    w3v = 1.0 + 0.2 * jax.random.normal(k3w, (B3 * C3,), jnp.float32)
    b3v = 0.1 * jax.random.normal(k3b, (B3 * C3,), jnp.float32)
    out3 = jax.block_until_ready(adaptive_instance_norm_2d(x3, w3v, b3v, eps=eps))
    ref3 = _reference_adain(x3, w3v, b3v, eps=eps)
    assert bool(jnp.allclose(out3, ref3, atol=1e-4, rtol=1e-4)), \
        float(jnp.max(jnp.abs(out3 - ref3)))

    # Config 4: B*C not a multiple of the block (partial last BC block; padded
    # rows compute garbage but their stores are masked by Pallas).
    B4, C4, H4, W4 = 1, 20, 8, 8
    k4x, k4w, k4b = jax.random.split(jax.random.fold_in(key, 11), 3)
    x4 = jax.random.normal(k4x, (B4, C4, H4, W4), jnp.float32)
    w4v = 1.0 + 0.2 * jax.random.normal(k4w, (B4 * C4,), jnp.float32)
    b4v = 0.1 * jax.random.normal(k4b, (B4 * C4,), jnp.float32)
    out4 = jax.block_until_ready(
        adaptive_instance_norm_2d(x4, w4v, b4v, eps=eps, block_bc=8))
    ref4 = _reference_adain(x4, w4v, b4v, eps=eps)
    assert bool(jnp.allclose(out4, ref4, atol=1e-4, rtol=1e-4)), \
        float(jnp.max(jnp.abs(out4 - ref4)))

    # Config 5: bfloat16 input (dtype-aware block_bc multiple of 16).
    B5, C5, H5, W5 = 2, 32, 16, 16
    k5x, k5w, k5b = jax.random.split(jax.random.fold_in(key, 13), 3)
    x5 = (1.5 * jax.random.normal(k5x, (B5, C5, H5, W5), jnp.float32)
          + 0.3).astype(jnp.bfloat16)
    w5v = 1.0 + 0.2 * jax.random.normal(k5w, (B5 * C5,), jnp.float32)
    b5v = 0.1 * jax.random.normal(k5b, (B5 * C5,), jnp.float32)
    out5 = jax.block_until_ready(adaptive_instance_norm_2d(x5, w5v, b5v, eps=eps))
    ref5 = _reference_adain(x5, w5v, b5v, eps=eps)
    assert out5.dtype == jnp.bfloat16
    assert bool(jnp.allclose(out5.astype(jnp.float32), ref5, atol=5e-2, rtol=5e-2)), \
        float(jnp.max(jnp.abs(out5.astype(jnp.float32) - ref5)))

    print("KERNEL_OK")
</pallas_src>

<mosaic_0001>
module attributes {stable_mosaic.version = 11 : i64} {
  func.func @_adain_fused_kernel(%arg0: i32, %arg1: memref<64x1024xf32, #tpu.memory_space<vmem>>, %arg2: memref<64x1xf32, #tpu.memory_space<vmem>>, %arg3: memref<64x1xf32, #tpu.memory_space<vmem>>, %arg4: memref<64x1024xf32, #tpu.memory_space<vmem>>) attributes {dimension_semantics = [#tpu.dimension_semantics<parallel>], iteration_bounds = array<i64: 2>, scalar_prefetch = 0 : i64, scratch_operands = 0 : i64, tpu.core_type = #tpu.core_type<tc>, window_params = [{transform_indices = @transform_0, window_bounds = array<i64: 64, 1024>}, {transform_indices = @transform_1, window_bounds = array<i64: 64, 1>}, {transform_indices = @transform_2, window_bounds = array<i64: 64, 1>}, {transform_indices = @transform_3, window_bounds = array<i64: 64, 1024>}]} {
    %c0 = arith.constant 0 : index
    %c0_0 = arith.constant 0 : index
    %0 = vector.load %arg1[%c0, %c0_0] : memref<64x1024xf32, #tpu.memory_space<vmem>>, vector<64x1024xf32>
    %cst = arith.constant dense<0.000000e+00> : vector<64xf32>
    %1 = vector.multi_reduction <add>, %0, %cst [1] : vector<64x1024xf32> to vector<64xf32>
    %2 = vector.shape_cast %1 : vector<64xf32> to vector<64x1xf32>
    %cst_1 = arith.constant 9.765625E-4 : f32
    %3 = vector.broadcast %cst_1 : f32 to vector<64x1xf32>
    %4 = arith.mulf %2, %3 : vector<64x1xf32>
    %5 = vector.broadcast %4 : vector<64x1xf32> to vector<64x1024xf32>
    %6 = arith.subf %0, %5 : vector<64x1024xf32>
    %7 = arith.mulf %6, %6 : vector<64x1024xf32>
    %cst_2 = arith.constant dense<0.000000e+00> : vector<64xf32>
    %8 = vector.multi_reduction <add>, %7, %cst_2 [1] : vector<64x1024xf32> to vector<64xf32>
    %9 = vector.shape_cast %8 : vector<64xf32> to vector<64x1xf32>
    %cst_3 = arith.constant 9.765625E-4 : f32
    %10 = vector.broadcast %cst_3 : f32 to vector<64x1xf32>
    %11 = arith.mulf %9, %10 : vector<64x1xf32>
    %cst_4 = arith.constant 9.99999974E-6 : f32
    %12 = vector.broadcast %cst_4 : f32 to vector<64x1xf32>
    %13 = arith.addf %11, %12 : vector<64x1xf32>
    %14 = math.rsqrt %13 : vector<64x1xf32>
    %c0_5 = arith.constant 0 : index
    %c0_6 = arith.constant 0 : index
    %15 = vector.load %arg2[%c0_5, %c0_6] : memref<64x1xf32, #tpu.memory_space<vmem>>, vector<64x1xf32>
    %16 = arith.mulf %15, %14 : vector<64x1xf32>
    %17 = vector.broadcast %16 : vector<64x1xf32> to vector<64x1024xf32>
    %18 = arith.mulf %6, %17 : vector<64x1024xf32>
    %c0_7 = arith.constant 0 : index
    %c0_8 = arith.constant 0 : index
    %19 = vector.load %arg3[%c0_7, %c0_8] : memref<64x1xf32, #tpu.memory_space<vmem>>, vector<64x1xf32>
    %20 = vector.broadcast %19 : vector<64x1xf32> to vector<64x1024xf32>
    %21 = arith.addf %18, %20 : vector<64x1024xf32>
    %c0_9 = arith.constant 0 : index
    %c0_10 = arith.constant 0 : index
    %22 = vector.load %arg4[%c0_9, %c0_10] : memref<64x1024xf32, #tpu.memory_space<vmem>>, vector<64x1024xf32>
    tpu.vector_store %arg4[%c0_9, %c0_10], %21 {strides = array<i32>} : memref<64x1024xf32, #tpu.memory_space<vmem>>, vector<64x1024xf32>,
    return
  }
  func.func @transform_0(%arg0: i32) -> (i32, i32) {
    %c0_i32 = arith.constant 0 : i32
    %c0_i32_0 = arith.constant 0 : i32
    return %arg0, %c0_i32 : i32, i32
  }
  func.func @transform_1(%arg0: i32) -> (i32, i32) {
    %c0_i32 = arith.constant 0 : i32
    %c0_i32_0 = arith.constant 0 : i32
    return %arg0, %c0_i32 : i32, i32
  }
  func.func @transform_2(%arg0: i32) -> (i32, i32) {
    %c0_i32 = arith.constant 0 : i32
    %c0_i32_0 = arith.constant 0 : i32
    return %arg0, %c0_i32 : i32, i32
  }
  func.func @transform_3(%arg0: i32) -> (i32, i32) {
    %c0_i32 = arith.constant 0 : i32
    %c0_i32_0 = arith.constant 0 : i32
    return %arg0, %c0_i32 : i32, i32
  }
}

</mosaic_0001>

<llo_original>
// kernel: tpu_custom_call.1
$region0: #{tpu_custom_call.1}
  #allocation0 [shape = 'u32[]', space=smem, size = 0x4, offset = 0x4, fixed_abs, tag = 'smem constant byte address 0x4 - core index']
  #allocation1 [shape = 'u32[144,128]{1,0:T(1,128)}', space=vmem, size = 0x12000, scoped, tag = 'internal scratch']
  %s0 = inlined_call_operand.hbm [shape: f32[128,1024], index: 0, kind: input, shape index: {}]
  %s1 = inlined_call_operand.vmem [shape: f32[128,1], index: 1, kind: input, shape index: {}]
  %s2 = inlined_call_operand.vmem [shape: f32[128,1], index: 2, kind: input, shape index: {}]
  %s3 = inlined_call_operand.hbm [shape: f32[128,1024], index: 3, kind: output, shape index: {}]
  %s4 = sld [smem:[#allocation0]]
  $region49: #{tpu_custom_call.1} parent=0
    _
  %s6 = ssub.s32 1, %s4
  %s7 = scalar_select 0, %s6, %s4
  $region1: #{tpu_custom_call.1} parent=0
    #allocation2 [shape = 'u8[524288]{0}', space=vmem, size = 0x80000, scoped, tag = 'input window, operand 0']
    #allocation3 [shape = 's32[2]{0}', space=sflag, size = 0x8, scoped, tag = 'scoped memory for tpu_custom_call.1']
    #allocation4 [shape = 's32[2]{0}', space=sflag, size = 0x8, scoped, tag = 'scoped memory for tpu_custom_call.1']
    #allocation5 [shape = 'u8[524288]{0}', space=vmem, size = 0x80000, scoped, tag = 'output window, operand 0']
    %8 = vsyncpa [#allocation3], 0
    %s9 = scalar_lea.sflag [#allocation3], 1
    %10 = vsyncpa %s9, 0
    %11 = vsyncpa [#allocation4], 0
    %s12 = scalar_lea.sflag [#allocation4], 1
    %13 = vsyncpa %s12, 0
    loop: start=0, step=1, limit=4
    $region2: #{tpu_custom_call.1} parent=1 // loop_pre_header
      _
    $region3: #{tpu_custom_call.1} parent=1 // loop_header
      %s15 = sphi 0, %s19
      %p16 = scmp.ge.s32.totalorder %s15, 4
      %s25 = sphi 0, %s27
      %s28 = sphi 0, %s25
      %s29 = sphi 0, %s28
      %s45 = sphi 0, %s29
      %s51 = sphi 0, %s53
      %s54 = sphi 0, %s51
      %s55 = sphi 0, %s54
      %s71 = sphi 0, %s55
      %s77 = sphi 0, %s79
      %s80 = sphi 0, %s77
      %s81 = sphi 0, %s80
      %s97 = sphi 0, %s81
      %s103 = sphi 0, %s105
      %s106 = sphi 0, %s103
      %s107 = sphi 0, %s106
      %s123 = sphi 0, %s107
    $region4: #{tpu_custom_call.1} parent=1 // loop_header_branch
      %18 = sbr.rel (%p16) target = $region8
    $region5: #{tpu_custom_call.1} parent=1 // loop_body
      %s20 = ssub.s32 %s15, 1
      %s21 = ssub.s32 %s15, 2
      %s22 = sadd.s32 %s15, 1
      %s23 = ssub.s32 %s15, %s22
      %p24 = scmp.eq.s32.totalorder %s23, 0
      %s26 = sadd.s32 %s25, 1
      %s27 = scalar_select %p24, %s25, %s26
      %p30 = pneg %p24
      %p31 = scmp.eq.s32.totalorder %s15, 1
      %p32 = por %p30, %p31
      %p33 = scmp.ne.s32.totalorder %s25, %s28
      %p34 = scmp.eq.s32.totalorder %s15, 0
      %p35 = por %p33, %p34
      %p36 = scmp.ne.s32.totalorder %s25, %s28
      %p37 = scmp.eq.s32.totalorder %s20, 1
      %p38 = por %p36, %p37
      %p39 = scmp.ne.s32.totalorder %s28, %s29
      %p40 = scmp.eq.s32.totalorder %s20, 0
      %p41 = por %p39, %p40
      %p42 = scmp.ne.s32.totalorder %s28, %s29
      %p43 = scmp.eq.s32.totalorder %s21, 1
      %p44 = por %p42, %p43
      %p46 = scmp.ne.s32.totalorder %s29, %s45
      %p47 = scmp.eq.s32.totalorder %s21, 0
      %p48 = por %p46, %p47
      %s49 = ssub.s32 %s15, %s22
      %p50 = scmp.eq.s32.totalorder %s49, 0
      %s52 = sadd.s32 %s51, 1
      %s53 = scalar_select %p50, %s51, %s52
      %p56 = pneg %p50
      %p57 = scmp.eq.s32.totalorder %s15, 1
      %p58 = por %p56, %p57
      %p59 = scmp.ne.s32.totalorder %s51, %s54
      %p60 = scmp.eq.s32.totalorder %s15, 0
      %p61 = por %p59, %p60
      %p62 = scmp.ne.s32.totalorder %s51, %s54
      %p63 = scmp.eq.s32.totalorder %s20, 1
      %p64 = por %p62, %p63
      %p65 = scmp.ne.s32.totalorder %s54, %s55
      %p66 = scmp.eq.s32.totalorder %s20, 0
      %p67 = por %p65, %p66
      %p68 = scmp.ne.s32.totalorder %s54, %s55
      %p69 = scmp.eq.s32.totalorder %s21, 1
      %p70 = por %p68, %p69
      %p72 = scmp.ne.s32.totalorder %s55, %s71
      %p73 = scmp.eq.s32.totalorder %s21, 0
      %p74 = por %p72, %p73
      %s75 = ssub.s32 %s15, %s22
      %p76 = scmp.eq.s32.totalorder %s75, 0
      %s78 = sadd.s32 %s77, 1
      %s79 = scalar_select %p76, %s77, %s78
      %p82 = pneg %p76
      %p83 = scmp.eq.s32.totalorder %s15, 1
      %p84 = por %p82, %p83
      %p85 = scmp.ne.s32.totalorder %s77, %s80
      %p86 = scmp.eq.s32.totalorder %s15, 0
      %p87 = por %p85, %p86
      %p88 = scmp.ne.s32.totalorder %s77, %s80
      %p89 = scmp.eq.s32.totalorder %s20, 1
      %p90 = por %p88, %p89
      %p91 = scmp.ne.s32.totalorder %s80, %s81
      %p92 = scmp.eq.s32.totalorder %s20, 0
      %p93 = por %p91, %p92
      %p94 = scmp.ne.s32.totalorder %s80, %s81
      %p95 = scmp.eq.s32.totalorder %s21, 1
      %p96 = por %p94, %p95
      %p98 = scmp.ne.s32.totalorder %s81, %s97
      %p99 = scmp.eq.s32.totalorder %s21, 0
      %p100 = por %p98, %p99
      %s101 = ssub.s32 %s15, %s22
      %p102 = scmp.eq.s32.totalorder %s101, 0
      %s104 = sadd.s32 %s103, 1
      %s105 = scalar_select %p102, %s103, %s104
      %p108 = pneg %p102
      %p109 = scmp.eq.s32.totalorder %s15, 1
      %p110 = por %p108, %p109
      %p111 = scmp.ne.s32.totalorder %s103, %s106
      %p112 = scmp.eq.s32.totalorder %s15, 0
      %p113 = por %p111, %p112
      %p114 = scmp.ne.s32.totalorder %s103, %s106
      %p115 = scmp.eq.s32.totalorder %s20, 1
      %p116 = por %p114, %p115
      %p117 = scmp.ne.s32.totalorder %s106, %s107
      %p118 = scmp.eq.s32.totalorder %s20, 0
      %p119 = por %p117, %p118
      %p120 = scmp.ne.s32.totalorder %s106, %s107
      %p121 = scmp.eq.s32.totalorder %s21, 1
      %p122 = por %p120, %p121
      %p124 = scmp.ne.s32.totalorder %s107, %s123
      %p125 = scmp.eq.s32.totalorder %s21, 0
      %p126 = por %p124, %p125
      %p127 = scmp.le.s32.totalorder 1, %s15
      %p128 = scmp.lt.s32.totalorder %s15, 3
      %p129 = pnand %p127, %p128
      %p130 = pneg %p129
      // Predicated region
      $region9: #{tpu_custom_call.1} parent=5 // pred_check
        _
      $region10: #{tpu_custom_call.1} parent=5 // pred_check_branch
        %132 = sbr.rel (%p129) target = $region12
      $region11: #{tpu_custom_call.1} parent=5 // pred_region
        %s133 = ssub.s32 %s15, 1
      $region12: #{tpu_custom_call.1} parent=5 // pred_fallthru
        _
      %p134 = scmp.lt.s32.totalorder %s15, 2
      // Predicated region
      $region13: #{tpu_custom_call.1} parent=5 // pred_check
        %p135 = pneg %p134
      $region14: #{tpu_custom_call.1} parent=5 // pred_check_branch
        %137 = sbr.rel (%p135) target = $region16
      $region15: #{tpu_custom_call.1} parent=5 // pred_region
        // Predicated region
        $region17: #{tpu_custom_call.1} parent=15 // pred_check
          %p138 = pneg %p35
        $region18: #{tpu_custom_call.1} parent=15 // pred_check_branch
          %140 = sbr.rel (%p138) target = $region20
        $region19: #{tpu_custom_call.1} parent=15 // pred_region
          %s141 = sand.u32 %s25, 1
          %s142 = scalar_lea.sflag [#allocation3], %s141
          %s143 = sand.u32 %s25, 1
          %s144 = smul.addr %s143, 512
          %s145 = scalar_lea.vmem [#allocation2], %s144
          %s146 = smul.u32 8, %s15
          %s148 = ssub.s32 8192, 8192
          %149 = vsyncadd %s142, %s148
          %s150 = smul.addr %s146, 8
          %s151 = smul.addr %s150, 128
          %s152 = scalar_lea.hbm %s0, %s151
          %s153 = sshll.u32 %s145, 4
          %s154 = int_to_ptr.vmem [resolvable:$true] %s153
          %159 = dma.hbm_to_vmem [thread:$0]  %s152, 8192, %s154, %s142, 1024, 1024, 64
        $region20: #{tpu_custom_call.1} parent=15 // pred_fallthru
          _
        // Predicated region
        $region21: #{tpu_custom_call.1} parent=15 // pred_check
          %p160 = pneg %p61
        $region22: #{tpu_custom_call.1} parent=15 // pred_check_branch
          %162 = sbr.rel (%p160) target = $region24
        $region23: #{tpu_custom_call.1} parent=15 // pred_region
          %s163 = smul.u32 8, %s15
          %p164 = scmp.lt.s32.totalorder %s163, 15
          %s165 = scalar_select %p164, %s163, 15
          %s166 = smul.addr %s165, 8
          %s167 = scalar_lea.vmem %s1, %s166
          %s168 = smul.u32 8, %s15
        $region24: #{tpu_custom_call.1} parent=15 // pred_fallthru
          _
        // Predicated region
        $region25: #{tpu_custom_call.1} parent=15 // pred_check
          %p169 = pneg %p87
        $region26: #{tpu_custom_call.1} parent=15 // pred_check_branch
          %171 = sbr.rel (%p169) target = $region28
        $region27: #{tpu_custom_call.1} parent=15 // pred_region
          %s172 = smul.u32 8, %s15
          %p173 = scmp.lt.s32.totalorder %s172, 15
          %s174 = scalar_select %p173, %s172, 15
          %s175 = smul.addr %s174, 8
          %s176 = scalar_lea.vmem %s2, %s175
          %s177 = smul.u32 8, %s15
        $region28: #{tpu_custom_call.1} parent=15 // pred_fallthru
          _
      $region16: #{tpu_custom_call.1} parent=5 // pred_fallthru
        _
      %p178 = scmp.le.s32.totalorder 1, %s15
      %p179 = scmp.lt.s32.totalorder %s15, 3
      %p180 = pnand %p178, %p179
      %p181 = pneg %p180
      // Predicated region
      $region29: #{tpu_custom_call.1} parent=5 // pred_check
        _
      $region30: #{tpu_custom_call.1} parent=5 // pred_check_branch
        %183 = sbr.rel (%p180) target = $region32
      $region31: #{tpu_custom_call.1} parent=5 // pred_region
        %s184 = ssub.s32 %s15, 1
        %s185 = sand.u32 %s28, 1
        %s186 = scalar_lea.sflag [#allocation3], %s185
        %s187 = sand.u32 %s28, 1
        %s188 = smul.addr %s187, 512
        %s189 = scalar_lea.vmem [#allocation2], %s188
        // Predicated region
        $region33: #{tpu_custom_call.1} parent=31 // pred_check
          %p190 = pneg %p41
        $region34: #{tpu_custom_call.1} parent=31 // pred_check_branch
          %192 = sbr.rel (%p190) target = $region36
        $region35: #{tpu_custom_call.1} parent=31 // pred_region
          %193 = dma.done %s186, 8192
        $region36: #{tpu_custom_call.1} parent=31 // pred_fallthru
          _
        %s194 = sand.u32 %s28, 1
        %s195 = scalar_lea.sflag [#allocation3], %s194
        %s196 = sand.u32 %s28, 1
        %s197 = smul.addr %s196, 512
        %s198 = scalar_lea.vmem [#allocation2], %s197
        %p199 = pneg %p41
        %p200 = pneg %p38
        %s201 = smul.u32 8, %s20
        %p202 = scmp.lt.s32.totalorder %s201, 15
        %s203 = scalar_select %p202, %s201, 15
        %s204 = smul.addr %s203, 8
        %s205 = scalar_lea.vmem %s1, %s204
        %p206 = pneg %p67
        %p207 = pneg %p64
        %s208 = smul.u32 8, %s20
        %p209 = scmp.lt.s32.totalorder %s208, 15
        %s210 = scalar_select %p209, %s208, 15
        %s211 = smul.addr %s210, 8
        %s212 = scalar_lea.vmem %s2, %s211
        %p213 = pneg %p93
        %p214 = pneg %p90
        %p215 = pneg %p119
        %p216 = pneg %p116
        %s217 = sand.u32 %s106, 1
        %s218 = scalar_lea.sflag [#allocation4], %s217
        %s219 = sand.u32 %s106, 1
        %s220 = smul.addr %s219, 512
        %s221 = scalar_lea.vmem [#allocation5], %s220
        %s222 = smul.u32 8, %s20
        %s223 = smul.u32 8, %s20
        %p224 = scmp.lt.s32.totalorder %s223, 15
        %s225 = scalar_select %p224, %s223, 15
        %s226 = smul.addr %s225, 8
        %s227 = scalar_lea.vmem %s1, %s226
        %s228 = smul.u32 8, %s20
        %s229 = smul.u32 8, %s20
        %p230 = scmp.lt.s32.totalorder %s229, 15
        %s231 = scalar_select %p230, %s229, 15
        %s232 = smul.addr %s231, 8
        %s233 = scalar_lea.vmem %s2, %s232
        %s234 = smul.u32 8, %s20
        %s235 = smul.u32 8, %s20
        %v236 = vld [vmem:[%s189] sm:$0xff]
        %v237 = vld [vmem:[%s189 + $0x8] sm:$0xff]
        %v238 = vld [vmem:[%s189 + $0x10] sm:$0xff]
        %v239 = vld [vmem:[%s189 + $0x18] sm:$0xff]
        %v240 = vld [vmem:[%s189 + $0x20] sm:$0xff]
        %v241 = vld [vmem:[%s189 + $0x28] sm:$0xff]
        %v242 = vld [vmem:[%s189 + $0x30] sm:$0xff]
        %v243 = vld [vmem:[%s189 + $0x38] sm:$0xff]
        %v244 = vld [vmem:[%s189 + $0x40] sm:$0xff]
        %v245 = vld [vmem:[%s189 + $0x48] sm:$0xff]
        %v246 = vld [vmem:[%s189 + $0x50] sm:$0xff]
        %v247 = vld [vmem:[%s189 + $0x58] sm:$0xff]
        %v248 = vld [vmem:[%s189 + $0x60] sm:$0xff]
        %v249 = vld [vmem:[%s189 + $0x68] sm:$0xff]
        %v250 = vld [vmem:[%s189 + $0x70] sm:$0xff]
        %v251 = vld [vmem:[%s189 + $0x78] sm:$0xff]
        %v252 = vld [vmem:[%s189 + $0x80] sm:$0xff]
        %v253 = vld [vmem:[%s189 + $0x88] sm:$0xff]
        %v254 = vld [vmem:[%s189 + $0x90] sm:$0xff]
        %v255 = vld [vmem:[%s189 + $0x98] sm:$0xff]
        %v256 = vld [vmem:[%s189 + $0xa0] sm:$0xff]
        %v257 = vld [vmem:[%s189 + $0xa8] sm:$0xff]
        %v258 = vld [vmem:[%s189 + $0xb0] sm:$0xff]
        %v259 = vld [vmem:[%s189 + $0xb8] sm:$0xff]
        %v260 = vld [vmem:[%s189 + $0xc0] sm:$0xff]
        %v261 = vld [vmem:[%s189 + $0xc8] sm:$0xff]
        %v262 = vld [vmem:[%s189 + $0xd0] sm:$0xff]
        %v263 = vld [vmem:[%s189 + $0xd8] sm:$0xff]
        %v264 = vld [vmem:[%s189 + $0xe0] sm:$0xff]
        %v265 = vld [vmem:[%s189 + $0xe8] sm:$0xff]
        %v266 = vld [vmem:[%s189 + $0xf0] sm:$0xff]
        %v267 = vld [vmem:[%s189 + $0xf8] sm:$0xff]
        %v268 = vld [vmem:[%s189 + $0x100] sm:$0xff]
        %v269 = vld [vmem:[%s189 + $0x108] sm:$0xff]
        %v270 = vld [vmem:[%s189 + $0x110] sm:$0xff]
        %v271 = vld [vmem:[%s189 + $0x118] sm:$0xff]
        %v272 = vld [vmem:[%s189 + $0x120] sm:$0xff]
        %v273 = vld [vmem:[%s189 + $0x128] sm:$0xff]
        %v274 = vld [vmem:[%s189 + $0x130] sm:$0xff]
        %v275 = vld [vmem:[%s189 + $0x138] sm:$0xff]
        %v276 = vld [vmem:[%s189 + $0x140] sm:$0xff]
        %v277 = vld [vmem:[%s189 + $0x148] sm:$0xff]
        %v278 = vld [vmem:[%s189 + $0x150] sm:$0xff]
        %v279 = vld [vmem:[%s189 + $0x158] sm:$0xff]
        %v280 = vld [vmem:[%s189 + $0x160] sm:$0xff]
        %v281 = vld [vmem:[%s189 + $0x168] sm:$0xff]
        %v282 = vld [vmem:[%s189 + $0x170] sm:$0xff]
        %v283 = vld [vmem:[%s189 + $0x178] sm:$0xff]
        %v284 = vld [vmem:[%s189 + $0x180] sm:$0xff]
        %v285 = vld [vmem:[%s189 + $0x188] sm:$0xff]
        %v286 = vld [vmem:[%s189 + $0x190] sm:$0xff]
        %v287 = vld [vmem:[%s189 + $0x198] sm:$0xff]
        %v288 = vld [vmem:[%s189 + $0x1a0] sm:$0xff]
        %v289 = vld [vmem:[%s189 + $0x1a8] sm:$0xff]
        %v290 = vld [vmem:[%s189 + $0x1b0] sm:$0xff]
        %v291 = vld [vmem:[%s189 + $0x1b8] sm:$0xff]
        %v292 = vld [vmem:[%s189 + $0x1c0] sm:$0xff]
        %v293 = vld [vmem:[%s189 + $0x1c8] sm:$0xff]
        %v294 = vld [vmem:[%s189 + $0x1d0] sm:$0xff]
        %v295 = vld [vmem:[%s189 + $0x1d8] sm:$0xff]
        %v296 = vld [vmem:[%s189 + $0x1e0] sm:$0xff]
        %v297 = vld [vmem:[%s189 + $0x1e8] sm:$0xff]
        %v298 = vld [vmem:[%s189 + $0x1f0] sm:$0xff]
        %v299 = vld [vmem:[%s189 + $0x1f8] sm:$0xff]
        %v300 = vadd.f32 %v236, %v237
        %v301 = vadd.f32 %v300, %v238
        %v302 = vadd.f32 %v301, %v239
        %v303 = vadd.f32 %v302, %v240
        %v304 = vadd.f32 %v303, %v241
        %v305 = vadd.f32 %v304, %v242
        %v306 = vadd.f32 %v305, %v243
        %307 = vadd.xlane.f32.xlu0 %v306
        %v308 = vpop.xlane.xlu0 %307
        %v309 = vadd.f32 %v244, %v245
        %v310 = vadd.f32 %v309, %v246
        %v311 = vadd.f32 %v310, %v247
        %v312 = vadd.f32 %v311, %v248
        %v313 = vadd.f32 %v312, %v249
        %v314 = vadd.f32 %v313, %v250
        %v315 = vadd.f32 %v314, %v251
        %316 = vadd.xlane.f32.xlu0 %v315
        %v317 = vpop.xlane.xlu0 %316
        %v318 = vadd.f32 %v252, %v253
        %v319 = vadd.f32 %v318, %v254
        %v320 = vadd.f32 %v319, %v255
        %v321 = vadd.f32 %v320, %v256
        %v322 = vadd.f32 %v321, %v257
        %v323 = vadd.f32 %v322, %v258
        %v324 = vadd.f32 %v323, %v259
        %325 = vadd.xlane.f32.xlu0 %v324
        %v326 = vpop.xlane.xlu0 %325
        %v327 = vadd.f32 %v260, %v261
        %v328 = vadd.f32 %v327, %v262
        %v329 = vadd.f32 %v328, %v263
        %v330 = vadd.f32 %v329, %v264
        %v331 = vadd.f32 %v330, %v265
        %v332 = vadd.f32 %v331, %v266
        %v333 = vadd.f32 %v332, %v267
        %334 = vadd.xlane.f32.xlu0 %v333
        %v335 = vpop.xlane.xlu0 %334
        %v336 = vadd.f32 %v268, %v269
        %v337 = vadd.f32 %v336, %v270
        %v338 = vadd.f32 %v337, %v271
        %v339 = vadd.f32 %v338, %v272
        %v340 = vadd.f32 %v339, %v273
        %v341 = vadd.f32 %v340, %v274
        %v342 = vadd.f32 %v341, %v275
        %343 = vadd.xlane.f32.xlu0 %v342
        %v344 = vpop.xlane.xlu0 %343
        %v345 = vadd.f32 %v276, %v277
        %v346 = vadd.f32 %v345, %v278
        %v347 = vadd.f32 %v346, %v279
        %v348 = vadd.f32 %v347, %v280
        %v349 = vadd.f32 %v348, %v281
        %v350 = vadd.f32 %v349, %v282
        %v351 = vadd.f32 %v350, %v283
        %352 = vadd.xlane.f32.xlu0 %v351
        %v353 = vpop.xlane.xlu0 %352
        %v354 = vadd.f32 %v284, %v285
        %v355 = vadd.f32 %v354, %v286
        %v356 = vadd.f32 %v355, %v287
        %v357 = vadd.f32 %v356, %v288
        %v358 = vadd.f32 %v357, %v289
        %v359 = vadd.f32 %v358, %v290
        %v360 = vadd.f32 %v359, %v291
        %361 = vadd.xlane.f32.xlu0 %v360
        %v362 = vpop.xlane.xlu0 %361
        %v363 = vadd.f32 %v292, %v293
        %v364 = vadd.f32 %v363, %v294
        %v365 = vadd.f32 %v364, %v295
        %v366 = vadd.f32 %v365, %v296
        %v367 = vadd.f32 %v366, %v297
        %v368 = vadd.f32 %v367, %v298
        %v369 = vadd.f32 %v368, %v299
        %370 = vadd.xlane.f32.xlu0 %v369
        %v371 = vpop.xlane.xlu0 %370
        %v372 = vmul.f32 %v308, 0.0009765625
        %v373 = vmul.f32 %v317, 0.0009765625
        %v374 = vmul.f32 %v326, 0.0009765625
        %v375 = vmul.f32 %v335, 0.0009765625
        %v376 = vmul.f32 %v344, 0.0009765625
        %v377 = vmul.f32 %v353, 0.0009765625
        %v378 = vmul.f32 %v362, 0.0009765625
        %v379 = vmul.f32 %v371, 0.0009765625
        %v380 = vsub.f32 %v236, %v372
        %v381 = vsub.f32 %v237, %v372
        %v382 = vsub.f32 %v238, %v372
        %v383 = vsub.f32 %v239, %v372
        %v384 = vsub.f32 %v240, %v372
        %v385 = vsub.f32 %v241, %v372
        %v386 = vsub.f32 %v242, %v372
        %v387 = vsub.f32 %v243, %v372
        %v388 = vsub.f32 %v244, %v373
        %v389 = vsub.f32 %v245, %v373
        %v390 = vsub.f32 %v246, %v373
        %v391 = vsub.f32 %v247, %v373
        %v392 = vsub.f32 %v248, %v373
        %v393 = vsub.f32 %v249, %v373
        %v394 = vsub.f32 %v250, %v373
        %v395 = vsub.f32 %v251, %v373
        %v396 = vsub.f32 %v252, %v374
        %v397 = vsub.f32 %v253, %v374
        %v398 = vsub.f32 %v254, %v374
        %v399 = vsub.f32 %v255, %v374
        %v400 = vsub.f32 %v256, %v374
        %v401 = vsub.f32 %v257, %v374
        %v402 = vsub.f32 %v258, %v374
        %v403 = vsub.f32 %v259, %v374
        %v404 = vsub.f32 %v260, %v375
        %v405 = vsub.f32 %v261, %v375
        %v406 = vsub.f32 %v262, %v375
        %v407 = vsub.f32 %v263, %v375
        %v408 = vsub.f32 %v264, %v375
        %v409 = vsub.f32 %v265, %v375
        %v410 = vsub.f32 %v266, %v375
        %v411 = vsub.f32 %v267, %v375
        %v412 = vsub.f32 %v268, %v376
        %v413 = vsub.f32 %v269, %v376
        %v414 = vsub.f32 %v270, %v376
        %v415 = vsub.f32 %v271, %v376
        %v416 = vsub.f32 %v272, %v376
        %v417 = vsub.f32 %v273, %v376
        %v418 = vsub.f32 %v274, %v376
        %v419 = vsub.f32 %v275, %v376
        %v420 = vsub.f32 %v276, %v377
        %v421 = vsub.f32 %v277, %v377
        %v422 = vsub.f32 %v278, %v377
        %v423 = vsub.f32 %v279, %v377
        %v424 = vsub.f32 %v280, %v377
        %v425 = vsub.f32 %v281, %v377
        %v426 = vsub.f32 %v282, %v377
        %v427 = vsub.f32 %v283, %v377
        %v428 = vsub.f32 %v284, %v378
        %v429 = vsub.f32 %v285, %v378
        %v430 = vsub.f32 %v286, %v378
        %v431 = vsub.f32 %v287, %v378
        %v432 = vsub.f32 %v288, %v378
        %v433 = vsub.f32 %v289, %v378
        %v434 = vsub.f32 %v290, %v378
        %v435 = vsub.f32 %v291, %v378
        %v436 = vsub.f32 %v292, %v379
        %v437 = vsub.f32 %v293, %v379
        %v438 = vsub.f32 %v294, %v379
        %v439 = vsub.f32 %v295, %v379
        %v440 = vsub.f32 %v296, %v379
        %v441 = vsub.f32 %v297, %v379
        %v442 = vsub.f32 %v298, %v379
        %v443 = vsub.f32 %v299, %v379
        %v444 = vmul.f32 %v380, %v380
        %v445 = vmul.f32 %v381, %v381
        %v446 = vmul.f32 %v382, %v382
        %v447 = vmul.f32 %v383, %v383
        %v448 = vmul.f32 %v384, %v384
        %v449 = vmul.f32 %v385, %v385
        %v450 = vmul.f32 %v386, %v386
        %v451 = vmul.f32 %v387, %v387
        %v452 = vmul.f32 %v388, %v388
        %v453 = vmul.f32 %v389, %v389
        %v454 = vmul.f32 %v390, %v390
        %v455 = vmul.f32 %v391, %v391
        %v456 = vmul.f32 %v392, %v392
        %v457 = vmul.f32 %v393, %v393
        %v458 = vmul.f32 %v394, %v394
        %v459 = vmul.f32 %v395, %v395
        %v460 = vmul.f32 %v396, %v396
        %v461 = vmul.f32 %v397, %v397
        %v462 = vmul.f32 %v398, %v398
        %v463 = vmul.f32 %v399, %v399
        %v464 = vmul.f32 %v400, %v400
        %v465 = vmul.f32 %v401, %v401
        %v466 = vmul.f32 %v402, %v402
        %v467 = vmul.f32 %v403, %v403
        %v468 = vmul.f32 %v404, %v404
        %v469 = vmul.f32 %v405, %v405
        %v470 = vmul.f32 %v406, %v406
        %v471 = vmul.f32 %v407, %v407
        %v472 = vmul.f32 %v408, %v408
        %v473 = vmul.f32 %v409, %v409
        %v474 = vmul.f32 %v410, %v410
        %v475 = vmul.f32 %v411, %v411
        %v476 = vmul.f32 %v412, %v412
        %v477 = vmul.f32 %v413, %v413
        %v478 = vmul.f32 %v414, %v414
        %v479 = vmul.f32 %v415, %v415
        %v480 = vmul.f32 %v416, %v416
        %v481 = vmul.f32 %v417, %v417
        %v482 = vmul.f32 %v418, %v418
        %v483 = vmul.f32 %v419, %v419
        %v484 = vmul.f32 %v420, %v420
        %v485 = vmul.f32 %v421, %v421
        %v486 = vmul.f32 %v422, %v422
        %v487 = vmul.f32 %v423, %v423
        %v488 = vmul.f32 %v424, %v424
        %v489 = vmul.f32 %v425, %v425
        %v490 = vmul.f32 %v426, %v426
        %v491 = vmul.f32 %v427, %v427
        %v492 = vmul.f32 %v428, %v428
        %v493 = vmul.f32 %v429, %v429
        %v494 = vmul.f32 %v430, %v430
        %v495 = vmul.f32 %v431, %v431
        %v496 = vmul.f32 %v432, %v432
        %v497 = vmul.f32 %v433, %v433
        %v498 = vmul.f32 %v434, %v434
        %v499 = vmul.f32 %v435, %v435
        %v500 = vmul.f32 %v436, %v436
        %v501 = vmul.f32 %v437, %v437
        %v502 = vmul.f32 %v438, %v438
        %v503 = vmul.f32 %v439, %v439
        %v504 = vmul.f32 %v440, %v440
        %v505 = vmul.f32 %v441, %v441
        %v506 = vmul.f32 %v442, %v442
        %v507 = vmul.f32 %v443, %v443
        %v508 = vadd.f32 %v444, %v445
        %v509 = vadd.f32 %v508, %v446
        %v510 = vadd.f32 %v509, %v447
        %v511 = vadd.f32 %v510, %v448
        %v512 = vadd.f32 %v511, %v449
        %v513 = vadd.f32 %v512, %v450
        %v514 = vadd.f32 %v513, %v451
        %515 = vadd.xlane.f32.xlu0 %v514
        %v516 = vpop.xlane.xlu0 %515
        %v517 = vadd.f32 %v452, %v453
        %v518 = vadd.f32 %v517, %v454
        %v519 = vadd.f32 %v518, %v455
        %v520 = vadd.f32 %v519, %v456
        %v521 = vadd.f32 %v520, %v457
        %v522 = vadd.f32 %v521, %v458
        %v523 = vadd.f32 %v522, %v459
        %524 = vadd.xlane.f32.xlu0 %v523
        %v525 = vpop.xlane.xlu0 %524
        %v526 = vadd.f32 %v460, %v461
        %v527 = vadd.f32 %v526, %v462
        %v528 = vadd.f32 %v527, %v463
        %v529 = vadd.f32 %v528, %v464
        %v530 = vadd.f32 %v529, %v465
        %v531 = vadd.f32 %v530, %v466
        %v532 = vadd.f32 %v531, %v467
        %533 = vadd.xlane.f32.xlu0 %v532
        %v534 = vpop.xlane.xlu0 %533
        %v535 = vadd.f32 %v468, %v469
        %v536 = vadd.f32 %v535, %v470
        %v537 = vadd.f32 %v536, %v471
        %v538 = vadd.f32 %v537, %v472
        %v539 = vadd.f32 %v538, %v473
        %v540 = vadd.f32 %v539, %v474
        %v541 = vadd.f32 %v540, %v475
        %542 = vadd.xlane.f32.xlu0 %v541
        %v543 = vpop.xlane.xlu0 %542
        %v544 = vadd.f32 %v476, %v477
        %v545 = vadd.f32 %v544, %v478
        %v546 = vadd.f32 %v545, %v479
        %v547 = vadd.f32 %v546, %v480
        %v548 = vadd.f32 %v547, %v481
        %v549 = vadd.f32 %v548, %v482
        %v550 = vadd.f32 %v549, %v483
        %551 = vadd.xlane.f32.xlu0 %v550
        %v552 = vpop.xlane.xlu0 %551
        %v553 = vadd.f32 %v484, %v485
        %v554 = vadd.f32 %v553, %v486
        %v555 = vadd.f32 %v554, %v487
        %v556 = vadd.f32 %v555, %v488
        %v557 = vadd.f32 %v556, %v489
        %v558 = vadd.f32 %v557, %v490
        %v559 = vadd.f32 %v558, %v491
        %560 = vadd.xlane.f32.xlu0 %v559
        %v561 = vpop.xlane.xlu0 %560
        %v562 = vadd.f32 %v492, %v493
        %v563 = vadd.f32 %v562, %v494
        %v564 = vadd.f32 %v563, %v495
        %v565 = vadd.f32 %v564, %v496
        %v566 = vadd.f32 %v565, %v497
        %v567 = vadd.f32 %v566, %v498
        %v568 = vadd.f32 %v567, %v499
        %569 = vadd.xlane.f32.xlu0 %v568
        %v570 = vpop.xlane.xlu0 %569
        %v571 = vadd.f32 %v500, %v501
        %v572 = vadd.f32 %v571, %v502
        %v573 = vadd.f32 %v572, %v503
        %v574 = vadd.f32 %v573, %v504
        %v575 = vadd.f32 %v574, %v505
        %v576 = vadd.f32 %v575, %v506
        %v577 = vadd.f32 %v576, %v507
        %578 = vadd.xlane.f32.xlu0 %v577
        %v579 = vpop.xlane.xlu0 %578
        %v580 = vmul.f32 %v516, 0.0009765625
        %v581 = vmul.f32 %v525, 0.0009765625
        %v582 = vmul.f32 %v534, 0.0009765625
        %v583 = vmul.f32 %v543, 0.0009765625
        %v584 = vmul.f32 %v552, 0.0009765625
        %v585 = vmul.f32 %v561, 0.0009765625
        %v586 = vmul.f32 %v570, 0.0009765625
        %v587 = vmul.f32 %v579, 0.0009765625
        %v588 = vadd.f32 %v580, 1e-05
        %v589 = vadd.f32 %v581, 1e-05
        %v590 = vadd.f32 %v582, 1e-05
        %v591 = vadd.f32 %v583, 1e-05
        %v592 = vadd.f32 %v584, 1e-05
        %v593 = vadd.f32 %v585, 1e-05
        %v594 = vadd.f32 %v586, 1e-05
        %v595 = vadd.f32 %v587, 1e-05
        %v596 = vrsqrt.pop %v588
        %v597 = vrsqrt.pop %v589
        %v598 = vrsqrt.pop %v590
        %v599 = vrsqrt.pop %v591
        %v600 = vrsqrt.pop %v592
        %v601 = vrsqrt.pop %v593
        %v602 = vrsqrt.pop %v594
        %v603 = vrsqrt.pop %v595
        %v604 = vld [vmem:[%s227] sm:$0xff]
        %v605 = vld [vmem:[%s227 + $0x8] sm:$0xff]
        %v606 = vld [vmem:[%s227 + $0x10] sm:$0xff]
        %v607 = vld [vmem:[%s227 + $0x18] sm:$0xff]
        %v608 = vld [vmem:[%s227 + $0x20] sm:$0xff]
        %v609 = vld [vmem:[%s227 + $0x28] sm:$0xff]
        %v610 = vld [vmem:[%s227 + $0x30] sm:$0xff]
        %v611 = vld [vmem:[%s227 + $0x38] sm:$0xff]
        %v612 = vmul.f32 %v604, %v596
        %v613 = vmul.f32 %v605, %v597
        %v614 = vmul.f32 %v606, %v598
        %v615 = vmul.f32 %v607, %v599
        %v616 = vmul.f32 %v608, %v600
        %v617 = vmul.f32 %v609, %v601
        %v618 = vmul.f32 %v610, %v602
        %v619 = vmul.f32 %v611, %v603
        %621 = vset.pattern.permute.xlu0 0
        %622 = vperm.xlu0 %621, %v612
        %v623 = vpop.permute.xlu0 %622
        %626 = vset.pattern.permute.xlu0 0
        %627 = vperm.xlu0 %626, %v613
        %v628 = vpop.permute.xlu0 %627
        %631 = vset.pattern.permute.xlu0 0
        %632 = vperm.xlu0 %631, %v614
        %v633 = vpop.permute.xlu0 %632
        %636 = vset.pattern.permute.xlu0 0
        %637 = vperm.xlu0 %636, %v615
        %v638 = vpop.permute.xlu0 %637
        %641 = vset.pattern.permute.xlu0 0
        %642 = vperm.xlu0 %641, %v616
        %v643 = vpop.permute.xlu0 %642
        %646 = vset.pattern.permute.xlu0 0
        %647 = vperm.xlu0 %646, %v617
        %v648 = vpop.permute.xlu0 %647
        %651 = vset.pattern.permute.xlu0 0
        %652 = vperm.xlu0 %651, %v618
        %v653 = vpop.permute.xlu0 %652
        %656 = vset.pattern.permute.xlu0 0
        %657 = vperm.xlu0 %656, %v619
        %v658 = vpop.permute.xlu0 %657
        %v660 = vmul.f32 %v380, %v623
        %v661 = vmul.f32 %v381, %v623
        %v662 = vmul.f32 %v382, %v623
        %v663 = vmul.f32 %v383, %v623
        %v664 = vmul.f32 %v384, %v623
        %v665 = vmul.f32 %v385, %v623
        %v666 = vmul.f32 %v386, %v623
        %v667 = vmul.f32 %v387, %v623
        %v668 = vmul.f32 %v388, %v628
        %v669 = vmul.f32 %v389, %v628
        %v670 = vmul.f32 %v390, %v628
        %v671 = vmul.f32 %v391, %v628
        %v672 = vmul.f32 %v392, %v628
        %v673 = vmul.f32 %v393, %v628
        %v674 = vmul.f32 %v394, %v628
        %v675 = vmul.f32 %v395, %v628
        %v676 = vmul.f32 %v396, %v633
        %v677 = vmul.f32 %v397, %v633
        %v678 = vmul.f32 %v398, %v633
        %v679 = vmul.f32 %v399, %v633
        %v680 = vmul.f32 %v400, %v633
        %v681 = vmul.f32 %v401, %v633
        %v682 = vmul.f32 %v402, %v633
        %v683 = vmul.f32 %v403, %v633
        %v684 = vmul.f32 %v404, %v638
        %v685 = vmul.f32 %v405, %v638
        %v686 = vmul.f32 %v406, %v638
        %v687 = vmul.f32 %v407, %v638
        %v688 = vmul.f32 %v408, %v638
        %v689 = vmul.f32 %v409, %v638
        %v690 = vmul.f32 %v410, %v638
        %v691 = vmul.f32 %v411, %v638
        %v692 = vmul.f32 %v412, %v643
        %v693 = vmul.f32 %v413, %v643
        %v694 = vmul.f32 %v414, %v643
        %v695 = vmul.f32 %v415, %v643
        %v696 = vmul.f32 %v416, %v643
        %v697 = vmul.f32 %v417, %v643
        %v698 = vmul.f32 %v418, %v643
        %v699 = vmul.f32 %v419, %v643
        %v700 = vmul.f32 %v420, %v648
        %v701 = vmul.f32 %v421, %v648
        %v702 = vmul.f32 %v422, %v648
        %v703 = vmul.f32 %v423, %v648
        %v704 = vmul.f32 %v424, %v648
        %v705 = vmul.f32 %v425, %v648
        %v706 = vmul.f32 %v426, %v648
        %v707 = vmul.f32 %v427, %v648
        %v708 = vmul.f32 %v428, %v653
        %v709 = vmul.f32 %v429, %v653
        %v710 = vmul.f32 %v430, %v653
        %v711 = vmul.f32 %v431, %v653
        %v712 = vmul.f32 %v432, %v653
        %v713 = vmul.f32 %v433, %v653
        %v714 = vmul.f32 %v434, %v653
        %v715 = vmul.f32 %v435, %v653
        %v716 = vmul.f32 %v436, %v658
        %v717 = vmul.f32 %v437, %v658
        %v718 = vmul.f32 %v438, %v658
        %v719 = vmul.f32 %v439, %v658
        %v720 = vmul.f32 %v440, %v658
        %v721 = vmul.f32 %v441, %v658
        %v722 = vmul.f32 %v442, %v658
        %v723 = vmul.f32 %v443, %v658
        %v724 = vld [vmem:[%s233] sm:$0xff]
        %v725 = vld [vmem:[%s233 + $0x8] sm:$0xff]
        %v726 = vld [vmem:[%s233 + $0x10] sm:$0xff]
        %v727 = vld [vmem:[%s233 + $0x18] sm:$0xff]
        %v728 = vld [vmem:[%s233 + $0x20] sm:$0xff]
        %v729 = vld [vmem:[%s233 + $0x28] sm:$0xff]
        %v730 = vld [vmem:[%s233 + $0x30] sm:$0xff]
        %v731 = vld [vmem:[%s233 + $0x38] sm:$0xff]
        %733 = vset.pattern.permute.xlu0 0
        %734 = vperm.xlu0 %733, %v724
        %v735 = vpop.permute.xlu0 %734
        %738 = vset.pattern.permute.xlu0 0
        %739 = vperm.xlu0 %738, %v725
        %v740 = vpop.permute.xlu0 %739
        %743 = vset.pattern.permute.xlu0 0
        %744 = vperm.xlu0 %743, %v726
        %v745 = vpop.permute.xlu0 %744
        %748 = vset.pattern.permute.xlu0 0
        %749 = vperm.xlu0 %748, %v727
        %v750 = vpop.permute.xlu0 %749
        %753 = vset.pattern.permute.xlu0 0
        %754 = vperm.xlu0 %753, %v728
        %v755 = vpop.permute.xlu0 %754
        %758 = vset.pattern.permute.xlu0 0
        %759 = vperm.xlu0 %758, %v729
        %v760 = vpop.permute.xlu0 %759
        %763 = vset.pattern.permute.xlu0 0
        %764 = vperm.xlu0 %763, %v730
        %v765 = vpop.permute.xlu0 %764
        %768 = vset.pattern.permute.xlu0 0
        %769 = vperm.xlu0 %768, %v731
        %v770 = vpop.permute.xlu0 %769
        %v772 = vadd.f32 %v660, %v735
        %v773 = vadd.f32 %v661, %v735
        %v774 = vadd.f32 %v662, %v735
        %v775 = vadd.f32 %v663, %v735
        %v776 = vadd.f32 %v664, %v735
        %v777 = vadd.f32 %v665, %v735
        %v778 = vadd.f32 %v666, %v735
        %v779 = vadd.f32 %v667, %v735
        %v780 = vadd.f32 %v668, %v740
        %v781 = vadd.f32 %v669, %v740
        %v782 = vadd.f32 %v670, %v740
        %v783 = vadd.f32 %v671, %v740
        %v784 = vadd.f32 %v672, %v740
        %v785 = vadd.f32 %v673, %v740
        %v786 = vadd.f32 %v674, %v740
        %v787 = vadd.f32 %v675, %v740
        %v788 = vadd.f32 %v676, %v745
        %v789 = vadd.f32 %v677, %v745
        %v790 = vadd.f32 %v678, %v745
        %v791 = vadd.f32 %v679, %v745
        %v792 = vadd.f32 %v680, %v745
        %v793 = vadd.f32 %v681, %v745
        %v794 = vadd.f32 %v682, %v745
        %v795 = vadd.f32 %v683, %v745
        %v796 = vadd.f32 %v684, %v750
        %v797 = vadd.f32 %v685, %v750
        %v798 = vadd.f32 %v686, %v750
        %v799 = vadd.f32 %v687, %v750
        %v800 = vadd.f32 %v688, %v750
        %v801 = vadd.f32 %v689, %v750
        %v802 = vadd.f32 %v690, %v750
        %v803 = vadd.f32 %v691, %v750
        %v804 = vadd.f32 %v692, %v755
        %v805 = vadd.f32 %v693, %v755
        %v806 = vadd.f32 %v694, %v755
        %v807 = vadd.f32 %v695, %v755
        %v808 = vadd.f32 %v696, %v755
        %v809 = vadd.f32 %v697, %v755
        %v810 = vadd.f32 %v698, %v755
        %v811 = vadd.f32 %v699, %v755
        %v812 = vadd.f32 %v700, %v760
        %v813 = vadd.f32 %v701, %v760
        %v814 = vadd.f32 %v702, %v760
        %v815 = vadd.f32 %v703, %v760
        %v816 = vadd.f32 %v704, %v760
        %v817 = vadd.f32 %v705, %v760
        %v818 = vadd.f32 %v706, %v760
        %v819 = vadd.f32 %v707, %v760
        %v820 = vadd.f32 %v708, %v765
        %v821 = vadd.f32 %v709, %v765
        %v822 = vadd.f32 %v710, %v765
        %v823 = vadd.f32 %v711, %v765
        %v824 = vadd.f32 %v712, %v765
        %v825 = vadd.f32 %v713, %v765
        %v826 = vadd.f32 %v714, %v765
        %v827 = vadd.f32 %v715, %v765
        %v828 = vadd.f32 %v716, %v770
        %v829 = vadd.f32 %v717, %v770
        %v830 = vadd.f32 %v718, %v770
        %v831 = vadd.f32 %v719, %v770
        %v832 = vadd.f32 %v720, %v770
        %v833 = vadd.f32 %v721, %v770
        %v834 = vadd.f32 %v722, %v770
        %v835 = vadd.f32 %v723, %v770
        %836 = vst [vmem:[%s221] sm:$0xff] %v772
        %837 = vst [vmem:[%s221 + $0x8] sm:$0xff] %v773
        %838 = vst [vmem:[%s221 + $0x10] sm:$0xff] %v774
        %839 = vst [vmem:[%s221 + $0x18] sm:$0xff] %v775
        %840 = vst [vmem:[%s221 + $0x20] sm:$0xff] %v776
        %841 = vst [vmem:[%s221 + $0x28] sm:$0xff] %v777
        %842 = vst [vmem:[%s221 + $0x30] sm:$0xff] %v778
        %843 = vst [vmem:[%s221 + $0x38] sm:$0xff] %v779
        %844 = vst [vmem:[%s221 + $0x40] sm:$0xff] %v780
        %845 = vst [vmem:[%s221 + $0x48] sm:$0xff] %v781
        %846 = vst [vmem:[%s221 + $0x50] sm:$0xff] %v782
        %847 = vst [vmem:[%s221 + $0x58] sm:$0xff] %v783
        %848 = vst [vmem:[%s221 + $0x60] sm:$0xff] %v784
        %849 = vst [vmem:[%s221 + $0x68] sm:$0xff] %v785
        %850 = vst [vmem:[%s221 + $0x70] sm:$0xff] %v786
        %851 = vst [vmem:[%s221 + $0x78] sm:$0xff] %v787
        %852 = vst [vmem:[%s221 + $0x80] sm:$0xff] %v788
        %853 = vst [vmem:[%s221 + $0x88] sm:$0xff] %v789
        %854 = vst [vmem:[%s221 + $0x90] sm:$0xff] %v790
        %855 = vst [vmem:[%s221 + $0x98] sm:$0xff] %v791
        %856 = vst [vmem:[%s221 + $0xa0] sm:$0xff] %v792
        %857 = vst [vmem:[%s221 + $0xa8] sm:$0xff] %v793
        %858 = vst [vmem:[%s221 + $0xb0] sm:$0xff] %v794
        %859 = vst [vmem:[%s221 + $0xb8] sm:$0xff] %v795
        %860 = vst [vmem:[%s221 + $0xc0] sm:$0xff] %v796
        %861 = vst [vmem:[%s221 + $0xc8] sm:$0xff] %v797
        %862 = vst [vmem:[%s221 + $0xd0] sm:$0xff] %v798
        %863 = vst [vmem:[%s221 + $0xd8] sm:$0xff] %v799
        %864 = vst [vmem:[%s221 + $0xe0] sm:$0xff] %v800
        %865 = vst [vmem:[%s221 + $0xe8] sm:$0xff] %v801
        %866 = vst [vmem:[%s221 + $0xf0] sm:$0xff] %v802
        %867 = vst [vmem:[%s221 + $0xf8] sm:$0xff] %v803
        %868 = vst [vmem:[%s221 + $0x100] sm:$0xff] %v804
        %869 = vst [vmem:[%s221 + $0x108] sm:$0xff] %v805
        %870 = vst [vmem:[%s221 + $0x110] sm:$0xff] %v806
        %871 = vst [vmem:[%s221 + $0x118] sm:$0xff] %v807
        %872 = vst [vmem:[%s221 + $0x120] sm:$0xff] %v808
        %873 = vst [vmem:[%s221 + $0x128] sm:$0xff] %v809
        %874 = vst [vmem:[%s221 + $0x130] sm:$0xff] %v810
        %875 = vst [vmem:[%s221 + $0x138] sm:$0xff] %v811
        %876 = vst [vmem:[%s221 + $0x140] sm:$0xff] %v812
        %877 = vst [vmem:[%s221 + $0x148] sm:$0xff] %v813
        %878 = vst [vmem:[%s221 + $0x150] sm:$0xff] %v814
        %879 = vst [vmem:[%s221 + $0x158] sm:$0xff] %v815
        %880 = vst [vmem:[%s221 + $0x160] sm:$0xff] %v816
        %881 = vst [vmem:[%s221 + $0x168] sm:$0xff] %v817
        %882 = vst [vmem:[%s221 + $0x170] sm:$0xff] %v818
        %883 = vst [vmem:[%s221 + $0x178] sm:$0xff] %v819
        %884 = vst [vmem:[%s221 + $0x180] sm:$0xff] %v820
        %885 = vst [vmem:[%s221 + $0x188] sm:$0xff] %v821
        %886 = vst [vmem:[%s221 + $0x190] sm:$0xff] %v822
        %887 = vst [vmem:[%s221 + $0x198] sm:$0xff] %v823
        %888 = vst [vmem:[%s221 + $0x1a0] sm:$0xff] %v824
        %889 = vst [vmem:[%s221 + $0x1a8] sm:$0xff] %v825
        %890 = vst [vmem:[%s221 + $0x1b0] sm:$0xff] %v826
        %891 = vst [vmem:[%s221 + $0x1b8] sm:$0xff] %v827
        %892 = vst [vmem:[%s221 + $0x1c0] sm:$0xff] %v828
        %893 = vst [vmem:[%s221 + $0x1c8] sm:$0xff] %v829
        %894 = vst [vmem:[%s221 + $0x1d0] sm:$0xff] %v830
        %895 = vst [vmem:[%s221 + $0x1d8] sm:$0xff] %v831
        %896 = vst [vmem:[%s221 + $0x1e0] sm:$0xff] %v832
        %897 = vst [vmem:[%s221 + $0x1e8] sm:$0xff] %v833
        %898 = vst [vmem:[%s221 + $0x1f0] sm:$0xff] %v834
        %899 = vst [vmem:[%s221 + $0x1f8] sm:$0xff] %v835
        %s900 = sand.u32 %s106, 1
        %s901 = scalar_lea.sflag [#allocation4], %s900
        %s902 = sand.u32 %s106, 1
        %s903 = smul.addr %s902, 512
        %s904 = scalar_lea.vmem [#allocation5], %s903
        // Predicated region
        $region37: #{tpu_custom_call.1} parent=31 // pred_check
          %p905 = pneg %p116
        $region38: #{tpu_custom_call.1} parent=31 // pred_check_branch
          %907 = sbr.rel (%p905) target = $region40
        $region39: #{tpu_custom_call.1} parent=31 // pred_region
          %s908 = smul.u32 8, %s20
          %s910 = ssub.s32 8192, 8192
          %911 = vsyncadd %s901, %s910
          %s912 = smul.addr %s908, 8
          %s913 = smul.addr %s912, 128
          %s914 = scalar_lea.hbm %s3, %s913
          %s915 = sshll.u32 %s904, 4
          %s916 = int_to_ptr.vmem [resolvable:$true] %s915
          %921 = dma.vmem_to_hbm [thread:$0]  %s916, 8192, %s914, %s901, 1024, 1024, 64
        $region40: #{tpu_custom_call.1} parent=31 // pred_fallthru
          _
      $region32: #{tpu_custom_call.1} parent=5 // pred_fallthru
        _
      %p922 = scmp.le.s32.totalorder 2, %s15
      // Predicated region
      $region41: #{tpu_custom_call.1} parent=5 // pred_check
        %p923 = pneg %p922
      $region42: #{tpu_custom_call.1} parent=5 // pred_check_branch
        %925 = sbr.rel (%p923) target = $region44
      $region43: #{tpu_custom_call.1} parent=5 // pred_region
        %s926 = ssub.s32 %s15, 2
        // Predicated region
        $region45: #{tpu_custom_call.1} parent=43 // pred_check
          %p927 = pneg %p122
        $region46: #{tpu_custom_call.1} parent=43 // pred_check_branch
          %929 = sbr.rel (%p927) target = $region48
        $region47: #{tpu_custom_call.1} parent=43 // pred_region
          %s930 = sand.u32 %s107, 1
          %s931 = scalar_lea.sflag [#allocation4], %s930
          %s932 = sand.u32 %s107, 1
          %s933 = smul.addr %s932, 512
          %s934 = scalar_lea.vmem [#allocation5], %s933
          %935 = dma.done %s931, 8192
        $region48: #{tpu_custom_call.1} parent=43 // pred_fallthru
          _
      $region44: #{tpu_custom_call.1} parent=5 // pred_fallthru
        _
    $region6: #{tpu_custom_call.1} parent=1 // loop_footer
      %s19 = sadd.s32 1, %s15
    $region7: #{tpu_custom_call.1} parent=1 // loop_footer_branch
      %14 = sbr.rel target = $region3
    $region8: #{tpu_custom_call.1} parent=1 // loop_exit
      _
    %936 = vsyncpa [#allocation3], 1
    %s937 = scalar_lea.sflag [#allocation3], 1
    %938 = vsyncpa %s937, 1
    %939 = vsyncpa [#allocation4], 1
    %s940 = scalar_lea.sflag [#allocation4], 1
    %941 = vsyncpa %s940, 1

</llo_original>
